<compile_context>
chip_gen: v6e
topology: v6e:2x2x1
jax: 0.10.0
libtpu: 0.0.40
codegen_flags: <defaults>
</compile_context>

<pallas_src>
import functools

import numpy as np
import jax
import jax.numpy as jnp
from jax import lax
from jax.experimental import pallas as pl
from jax.experimental.pallas import tpu as pltpu

EPS = 1e-5  # nn.BatchNorm1d default eps


def _round_up(v, m):
    return (v + m - 1) // m * m


# -----------------------------------------------------------------------------
# Kernel: one Linear + BN(train) + ReLU layer, two-pass over M tiles.
# -----------------------------------------------------------------------------
def _pblock_layer_kernel(x_ref, w_ref, g_ref, b_ref, o_ref,
                         c_ref, sum_ref, sq_ref, scale_ref, shift_ref,
                         *, m_true, tm, mask_rows):
    p = pl.program_id(0)          # 0 = statistics pass, 1 = apply pass
    m = pl.program_id(1)          # row-tile index
    nm = pl.num_programs(1)

    # Linear on the MXU: x and w both arrive in bf16, f32 accumulation.
    # The Linear bias is omitted on purpose: a per-channel constant shift
    # cancels exactly in training-mode BatchNorm.
    y = jnp.dot(x_ref[...], w_ref[...],
                preferred_element_type=jnp.float32)          # (tm, U) f32

    @pl.when((p == 0) & (m == 0))
    def _init():
        # Per-channel shift c ~ mean, estimated from the first tile; used for a
        # shifted sum-of-squares so the variance does not catastrophically
        # cancel when |mean| >> std.  c need not be exact - the final formula
        # corrects for any shift.
        c_ref[...] = jnp.mean(y, axis=0, keepdims=True)
        sum_ref[...] = jnp.zeros_like(sum_ref)
        sq_ref[...] = jnp.zeros_like(sq_ref)

    def _accumulate(d):
        sum_ref[...] += jnp.sum(d, axis=0, keepdims=True)
        sq_ref[...] += jnp.sum(d * d, axis=0, keepdims=True)

    if mask_rows:
        # Padded rows only exist in the final M tile; mask their contribution
        # (with the shift, a zero row would otherwise contribute -c, c^2).
        @pl.when((p == 0) & (m != nm - 1))
        def _acc_full():
            _accumulate(y - c_ref[...])

        @pl.when((p == 0) & (m == nm - 1))
        def _acc_tail():
            row = m * tm + lax.broadcasted_iota(jnp.int32, y.shape, 0)
            _accumulate(jnp.where(row < m_true, y - c_ref[...], 0.0))
    else:
        @pl.when(p == 0)
        def _acc():
            _accumulate(y - c_ref[...])

    @pl.when((p == 0) & (m == nm - 1))
    def _finalize():
        # Biased variance over the *true* row count.  Fold BN normalize +
        # affine into one FMA: out = y * scale + shift.
        inv_m = jnp.float32(1.0 / m_true)
        s1 = sum_ref[...] * inv_m                 # E[y - c]
        var = jnp.maximum(sq_ref[...] * inv_m - s1 * s1, 0.0)
        mean = c_ref[...] + s1
        scale = g_ref[...] * lax.rsqrt(var + EPS)
        scale_ref[...] = scale
        shift_ref[...] = b_ref[...] - mean * scale

    def _bn_relu(yv):
        return jnp.maximum(yv * scale_ref[...] + shift_ref[...], 0.0)

    if mask_rows:
        @pl.when((p == 1) & (m != nm - 1))
        def _apply_full():
            o_ref[...] = _bn_relu(y).astype(o_ref.dtype)

        @pl.when((p == 1) & (m == nm - 1))
        def _apply_tail():
            # Zero padded rows (last tile only) so the stored activation block
            # stays finite / deterministic for the next layer.
            out = _bn_relu(y)
            row = m * tm + lax.broadcasted_iota(jnp.int32, out.shape, 0)
            o_ref[...] = jnp.where(row < m_true, out, 0.0).astype(o_ref.dtype)
    else:
        @pl.when(p == 1)
        def _apply():
            o_ref[...] = _bn_relu(y).astype(o_ref.dtype)


def _pblock_layer(h, w_t, gamma, beta, *, m_true, tm, out_dtype):
    """h: (M_pad, K) bf16; w_t: (K, U_pad) bf16; gamma/beta: (1, U_pad) f32."""
    m_pad, k = h.shape
    u_pad = w_t.shape[1]
    n_tiles = m_pad // tm

    kernel = functools.partial(
        _pblock_layer_kernel,
        m_true=m_true, tm=tm, mask_rows=(m_pad != m_true),
    )

    return pl.pallas_call(
        kernel,
        out_shape=jax.ShapeDtypeStruct((m_pad, u_pad), out_dtype),
        grid_spec=pltpu.PrefetchScalarGridSpec(
            num_scalar_prefetch=0,
            grid=(2, n_tiles),                     # (pass, M tile)
            in_specs=[
                pl.BlockSpec((tm, k), lambda p, m: (m, 0)),       # x tile (bf16)
                pl.BlockSpec((k, u_pad), lambda p, m: (0, 0)),    # weight (resident)
                pl.BlockSpec((1, u_pad), lambda p, m: (0, 0)),    # gamma
                pl.BlockSpec((1, u_pad), lambda p, m: (0, 0)),    # beta
            ],
            # Pass 0 parks the output window on block 0 (never stored there),
            # so no spurious write-backs happen under the sequential iteration
            # order; pass 1 walks blocks 0..n-1.
            out_specs=pl.BlockSpec((tm, u_pad), lambda p, m: (p * m, 0)),
            # c (shift), sum, sumsq, scale, shift
            scratch_shapes=[pltpu.VMEM((1, u_pad), jnp.float32)] * 5,
        ),
        compiler_params=pltpu.CompilerParams(
            # Both axes are sequential: pass 1 depends on pass 0's stats and
            # the stats scratch accumulates across M tiles.
            dimension_semantics=("arbitrary", "arbitrary"),
            # Cap so tm=1024, K/U<=1024 double-buffered fits v7x's 64 MiB VMEM
            # as well as v5e/v6e's 128 MiB.
            vmem_limit_bytes=48 * 1024 * 1024,
        ),
    )(h, w_t, gamma, beta)


# -----------------------------------------------------------------------------
# Parameters (PyTorch-layout), one-time packing, and forward pass.
# -----------------------------------------------------------------------------
def init_pblock_params(key, iu, units):
    """Synthetic params with nn.Linear / nn.BatchNorm1d shapes."""
    params = []
    ux = iu
    for uy in units:
        key, kw, kb, kg, kbt = jax.random.split(key, 5)
        w = jax.random.normal(kw, (uy, ux), jnp.float32) * 0.1      # Linear.weight
        b = jax.random.normal(kb, (uy,), jnp.float32) * 0.01        # Linear.bias
        gamma = 1.0 + 0.1 * jax.random.normal(kg, (uy,), jnp.float32)  # BN.weight
        beta = 0.05 * jax.random.normal(kbt, (uy,), jnp.float32)       # BN.bias
        params.append((w, b, gamma, beta))
        ux = uy
    return params


def prepare_pblock_params(params, iu):
    """One-time packing: transpose + zero-pad + bf16 cast of Linear weights and
    channel-padded BN affine params.  Hoisted out of the per-call jit so these
    HBM writes do not run on every forward call."""
    packed = []
    k_in = iu
    last_u = iu
    for (w, b, gamma, beta) in params:
        del b          # Linear bias cancels exactly under training-mode BN
        uy, ux = w.shape
        u_pad = _round_up(uy, 128)           # lane-dense output channels
        w_t = jnp.zeros((k_in, u_pad), jnp.float32).at[:ux, :uy].set(w.T)
        w_t = w_t.astype(jnp.bfloat16)       # bf16 MXU weights, half the DMA
        g = jnp.zeros((1, u_pad), jnp.float32).at[0, :uy].set(gamma)
        bt = jnp.zeros((1, u_pad), jnp.float32).at[0, :uy].set(beta)
        packed.append((w_t, g, bt))
        k_in = u_pad
        last_u = uy
    return packed, last_u


@functools.partial(jax.jit, static_argnames=("last_u", "should_perm"))
def pblock_forward(x, packed_params, *, last_u, should_perm=True):
    assert should_perm
    B, N, C = x.shape
    M = B * N
    # Row tile: up to 1024 rows (longer DMA bursts, fewer grid-step overheads),
    # shrunk (8-aligned) for small inputs.  With the 48 MiB vmem cap this fits
    # all of v5e / v6e / v7x even with K,U padded to 1024.
    tm = min(1024, _round_up(M, 8))
    m_pad = _round_up(M, tm)

    # bf16 activations end-to-end: halves activation HBM traffic (read twice +
    # written once per layer).  BN math inside the kernel stays f32.
    h = x.reshape(M, C).astype(jnp.bfloat16)
    if m_pad != M:
        h = jnp.pad(h, ((0, m_pad - M), (0, 0)))

    n_layers = len(packed_params)
    for i, (w_t, g, bt) in enumerate(packed_params):
        out_dtype = jnp.float32 if i == n_layers - 1 else jnp.bfloat16
        h = _pblock_layer(h, w_t, g, bt, m_true=M, tm=tm, out_dtype=out_dtype)

    return h[:M, :last_u].reshape(B, N, last_u)


def pblock_reference(x, params):
    """Pure-JAX f32 reference (includes the Linear bias; it must cancel)."""
    B, N, C = x.shape
    h = x.reshape(B * N, C)
    for (w, b, gamma, beta) in params:
        y = h @ w.T + b
        mean = jnp.mean(y, axis=0)
        var = jnp.mean((y - mean) ** 2, axis=0)          # biased variance
        y = (y - mean) * lax.rsqrt(var + EPS)
        h = jnp.maximum(gamma * y + beta, 0.0)
    return h.reshape(B, N, -1)


if __name__ == "__main__":
    key = jax.random.PRNGKey(0)
    k_x, k_p, k_x2 = jax.random.split(key, 3)

    B, N, IU = 2, 8, 16
    UNITS = (32, 64)

    params = init_pblock_params(k_p, IU, UNITS)
    packed_params, last_u = prepare_pblock_params(params, IU)

    x = jax.random.normal(k_x, (B, N, IU), jnp.float32)
    out = jax.block_until_ready(
        pblock_forward(x, packed_params, last_u=last_u, should_perm=True))
    assert out.shape == (B, N, UNITS[-1])
    assert bool(jnp.all(jnp.isfinite(out)))
    ref = pblock_reference(x, params)
    np.testing.assert_allclose(np.asarray(out), np.asarray(ref), rtol=0.1, atol=0.1)

    # Second case exercises row padding + masking (M = 10 is not 8-aligned).
    x2 = jax.random.normal(k_x2, (2, 5, IU), jnp.float32)
    out2 = jax.block_until_ready(
        pblock_forward(x2, packed_params, last_u=last_u, should_perm=True))
    ref2 = pblock_reference(x2, params)
    np.testing.assert_allclose(np.asarray(out2), np.asarray(ref2), rtol=0.1, atol=0.1)

    print("KERNEL_OK")
</pallas_src>

<mosaic_0001>
module attributes {stable_mosaic.version = 11 : i64} {
  func.func @_pblock_layer_kernel(%arg0: i32, %arg1: i32, %arg2: memref<16x16xbf16, #tpu.memory_space<vmem>>, %arg3: memref<16x128xbf16, #tpu.memory_space<vmem>>, %arg4: memref<1x128xf32, #tpu.memory_space<vmem>>, %arg5: memref<1x128xf32, #tpu.memory_space<vmem>>, %arg6: memref<16x128xbf16, #tpu.memory_space<vmem>>, %arg7: memref<1x128xf32, #tpu.memory_space<vmem>>, %arg8: memref<1x128xf32, #tpu.memory_space<vmem>>, %arg9: memref<1x128xf32, #tpu.memory_space<vmem>>, %arg10: memref<1x128xf32, #tpu.memory_space<vmem>>, %arg11: memref<1x128xf32, #tpu.memory_space<vmem>>) attributes {dimension_semantics = [#tpu.dimension_semantics<arbitrary>, #tpu.dimension_semantics<arbitrary>], iteration_bounds = array<i64: 2, 1>, scalar_prefetch = 0 : i64, scratch_operands = 5 : i64, tpu.core_type = #tpu.core_type<tc>, window_params = [{transform_indices = @transform_0, window_bounds = array<i64: 16, 16>}, {pipeline_mode = #tpu.pipeline_mode<synchronous>, transform_indices = @transform_1, window_bounds = array<i64: 16, 128>}, {pipeline_mode = #tpu.pipeline_mode<synchronous>, transform_indices = @transform_2, window_bounds = array<i64: 1, 128>}, {pipeline_mode = #tpu.pipeline_mode<synchronous>, transform_indices = @transform_3, window_bounds = array<i64: 1, 128>}, {transform_indices = @transform_4, window_bounds = array<i64: 16, 128>}]} {
    %c0 = arith.constant 0 : index
    %c0_0 = arith.constant 0 : index
    %0 = vector.load %arg2[%c0, %c0_0] : memref<16x16xbf16, #tpu.memory_space<vmem>>, vector<16x16xbf16>
    %c0_1 = arith.constant 0 : index
    %c0_2 = arith.constant 0 : index
    %1 = vector.load %arg3[%c0_1, %c0_2] : memref<16x128xbf16, #tpu.memory_space<vmem>>, vector<16x128xbf16>
    %cst = arith.constant dense<0.000000e+00> : vector<16x128xf32>
    %2 = tpu.matmul %0, %1, %cst {dimension_numbers = #tpu.dot_dimension_numbers<[1], [0], [0], [1], [0, 0, 1, 1], [], []>} : vector<16x16xbf16>, vector<16x128xbf16>, vector<16x128xf32> -> vector<16x128xf32>
    %c0_i32 = arith.constant 0 : i32
    %3 = arith.cmpi eq, %arg0, %c0_i32 : i32
    %c0_i32_3 = arith.constant 0 : i32
    %4 = arith.cmpi eq, %arg1, %c0_i32_3 : i32
    %5 = arith.andi %3, %4 : i1
    %6 = arith.extui %5 : i1 to i32
    %c0_i32_4 = arith.constant 0 : i32
    %7 = arith.cmpi ne, %6, %c0_i32_4 : i32
    scf.if %7 {
      %cst_11 = arith.constant dense<0.000000e+00> : vector<128xf32>
      %19 = vector.multi_reduction <add>, %2, %cst_11 [0] : vector<16x128xf32> to vector<128xf32>
      %20 = vector.shape_cast %19 : vector<128xf32> to vector<1x128xf32>
      %cst_12 = arith.constant 1.600000e+01 : f32
      %21 = vector.broadcast %cst_12 : f32 to vector<1x128xf32>
      %22 = arith.divf %20, %21 : vector<1x128xf32>
      %c0_13 = arith.constant 0 : index
      %c0_14 = arith.constant 0 : index
      %23 = vector.load %arg7[%c0_13, %c0_14] : memref<1x128xf32, #tpu.memory_space<vmem>>, vector<1x128xf32>
      tpu.vector_store %arg7[%c0_13, %c0_14], %22 {strides = array<i32>} : memref<1x128xf32, #tpu.memory_space<vmem>>, vector<1x128xf32>,
      %cst_15 = arith.constant 0.000000e+00 : f32
      %24 = vector.broadcast %cst_15 : f32 to vector<1x128xf32>
      %c0_16 = arith.constant 0 : index
      %c0_17 = arith.constant 0 : index
      %25 = vector.load %arg8[%c0_16, %c0_17] : memref<1x128xf32, #tpu.memory_space<vmem>>, vector<1x128xf32>
      tpu.vector_store %arg8[%c0_16, %c0_17], %24 {strides = array<i32>} : memref<1x128xf32, #tpu.memory_space<vmem>>, vector<1x128xf32>,
      %cst_18 = arith.constant 0.000000e+00 : f32
      %26 = vector.broadcast %cst_18 : f32 to vector<1x128xf32>
      %c0_19 = arith.constant 0 : index
      %c0_20 = arith.constant 0 : index
      %27 = vector.load %arg9[%c0_19, %c0_20] : memref<1x128xf32, #tpu.memory_space<vmem>>, vector<1x128xf32>
      tpu.vector_store %arg9[%c0_19, %c0_20], %26 {strides = array<i32>} : memref<1x128xf32, #tpu.memory_space<vmem>>, vector<1x128xf32>,
    } else {
    }
    %c0_i32_5 = arith.constant 0 : i32
    %8 = arith.cmpi eq, %arg0, %c0_i32_5 : i32
    %9 = arith.extui %8 : i1 to i32
    %c0_i32_6 = arith.constant 0 : i32
    %10 = arith.cmpi ne, %9, %c0_i32_6 : i32
    scf.if %10 {
      %c0_11 = arith.constant 0 : index
      %c0_12 = arith.constant 0 : index
      %19 = vector.load %arg7[%c0_11, %c0_12] : memref<1x128xf32, #tpu.memory_space<vmem>>, vector<1x128xf32>
      %20 = vector.broadcast %19 : vector<1x128xf32> to vector<16x128xf32>
      %21 = arith.subf %2, %20 : vector<16x128xf32>
      %c0_13 = arith.constant 0 : index
      %c0_14 = arith.constant 0 : index
      %22 = vector.load %arg8[%c0_13, %c0_14] : memref<1x128xf32, #tpu.memory_space<vmem>>, vector<1x128xf32>
      %cst_15 = arith.constant dense<0.000000e+00> : vector<128xf32>
      %23 = vector.multi_reduction <add>, %21, %cst_15 [0] : vector<16x128xf32> to vector<128xf32>
      %24 = vector.shape_cast %23 : vector<128xf32> to vector<1x128xf32>
      %25 = arith.addf %22, %24 : vector<1x128xf32>
      %c0_16 = arith.constant 0 : index
      %c0_17 = arith.constant 0 : index
      %26 = vector.load %arg8[%c0_16, %c0_17] : memref<1x128xf32, #tpu.memory_space<vmem>>, vector<1x128xf32>
      tpu.vector_store %arg8[%c0_16, %c0_17], %25 {strides = array<i32>} : memref<1x128xf32, #tpu.memory_space<vmem>>, vector<1x128xf32>,
      %c0_18 = arith.constant 0 : index
      %c0_19 = arith.constant 0 : index
      %27 = vector.load %arg9[%c0_18, %c0_19] : memref<1x128xf32, #tpu.memory_space<vmem>>, vector<1x128xf32>
      %28 = arith.mulf %21, %21 : vector<16x128xf32>
      %cst_20 = arith.constant dense<0.000000e+00> : vector<128xf32>
      %29 = vector.multi_reduction <add>, %28, %cst_20 [0] : vector<16x128xf32> to vector<128xf32>
      %30 = vector.shape_cast %29 : vector<128xf32> to vector<1x128xf32>
      %31 = arith.addf %27, %30 : vector<1x128xf32>
      %c0_21 = arith.constant 0 : index
      %c0_22 = arith.constant 0 : index
      %32 = vector.load %arg9[%c0_21, %c0_22] : memref<1x128xf32, #tpu.memory_space<vmem>>, vector<1x128xf32>
      tpu.vector_store %arg9[%c0_21, %c0_22], %31 {strides = array<i32>} : memref<1x128xf32, #tpu.memory_space<vmem>>, vector<1x128xf32>,
    } else {
    }
    %c0_i32_7 = arith.constant 0 : i32
    %11 = arith.cmpi eq, %arg0, %c0_i32_7 : i32
    %c0_i32_8 = arith.constant 0 : i32
    %12 = arith.cmpi eq, %arg1, %c0_i32_8 : i32
    %13 = arith.andi %11, %12 : i1
    %14 = arith.extui %13 : i1 to i32
    %c0_i32_9 = arith.constant 0 : i32
    %15 = arith.cmpi ne, %14, %c0_i32_9 : i32
    scf.if %15 {
      %c0_11 = arith.constant 0 : index
      %c0_12 = arith.constant 0 : index
      %19 = vector.load %arg8[%c0_11, %c0_12] : memref<1x128xf32, #tpu.memory_space<vmem>>, vector<1x128xf32>
      %cst_13 = arith.constant 6.250000e-02 : f32
      %20 = vector.broadcast %cst_13 : f32 to vector<1x128xf32>
      %21 = arith.mulf %19, %20 : vector<1x128xf32>
      %c0_14 = arith.constant 0 : index
      %c0_15 = arith.constant 0 : index
      %22 = vector.load %arg9[%c0_14, %c0_15] : memref<1x128xf32, #tpu.memory_space<vmem>>, vector<1x128xf32>
      %cst_16 = arith.constant 6.250000e-02 : f32
      %23 = vector.broadcast %cst_16 : f32 to vector<1x128xf32>
      %24 = arith.mulf %22, %23 : vector<1x128xf32>
      %25 = arith.mulf %21, %21 : vector<1x128xf32>
      %26 = arith.subf %24, %25 : vector<1x128xf32>
      %cst_17 = arith.constant 0.000000e+00 : f32
      %27 = vector.broadcast %cst_17 : f32 to vector<1x128xf32>
      %28 = arith.maximumf %26, %27 : vector<1x128xf32>
      %c0_18 = arith.constant 0 : index
      %c0_19 = arith.constant 0 : index
      %29 = vector.load %arg7[%c0_18, %c0_19] : memref<1x128xf32, #tpu.memory_space<vmem>>, vector<1x128xf32>
      %30 = arith.addf %29, %21 : vector<1x128xf32>
      %c0_20 = arith.constant 0 : index
      %c0_21 = arith.constant 0 : index
      %31 = vector.load %arg4[%c0_20, %c0_21] : memref<1x128xf32, #tpu.memory_space<vmem>>, vector<1x128xf32>
      %cst_22 = arith.constant 9.99999974E-6 : f32
      %32 = vector.broadcast %cst_22 : f32 to vector<1x128xf32>
      %33 = arith.addf %28, %32 : vector<1x128xf32>
      %34 = math.rsqrt %33 : vector<1x128xf32>
      %35 = arith.mulf %31, %34 : vector<1x128xf32>
      %c0_23 = arith.constant 0 : index
      %c0_24 = arith.constant 0 : index
      %36 = vector.load %arg10[%c0_23, %c0_24] : memref<1x128xf32, #tpu.memory_space<vmem>>, vector<1x128xf32>
      tpu.vector_store %arg10[%c0_23, %c0_24], %35 {strides = array<i32>} : memref<1x128xf32, #tpu.memory_space<vmem>>, vector<1x128xf32>,
      %c0_25 = arith.constant 0 : index
      %c0_26 = arith.constant 0 : index
      %37 = vector.load %arg5[%c0_25, %c0_26] : memref<1x128xf32, #tpu.memory_space<vmem>>, vector<1x128xf32>
      %38 = arith.mulf %30, %35 : vector<1x128xf32>
      %39 = arith.subf %37, %38 : vector<1x128xf32>
      %c0_27 = arith.constant 0 : index
      %c0_28 = arith.constant 0 : index
      %40 = vector.load %arg11[%c0_27, %c0_28] : memref<1x128xf32, #tpu.memory_space<vmem>>, vector<1x128xf32>
      tpu.vector_store %arg11[%c0_27, %c0_28], %39 {strides = array<i32>} : memref<1x128xf32, #tpu.memory_space<vmem>>, vector<1x128xf32>,
    } else {
    }
    %c1_i32 = arith.constant 1 : i32
    %16 = arith.cmpi eq, %arg0, %c1_i32 : i32
    %17 = arith.extui %16 : i1 to i32
    %c0_i32_10 = arith.constant 0 : i32
    %18 = arith.cmpi ne, %17, %c0_i32_10 : i32
    scf.if %18 {
      %c0_11 = arith.constant 0 : index
      %c0_12 = arith.constant 0 : index
      %19 = vector.load %arg10[%c0_11, %c0_12] : memref<1x128xf32, #tpu.memory_space<vmem>>, vector<1x128xf32>
      %20 = vector.broadcast %19 : vector<1x128xf32> to vector<16x128xf32>
      %21 = arith.mulf %2, %20 : vector<16x128xf32>
      %c0_13 = arith.constant 0 : index
      %c0_14 = arith.constant 0 : index
      %22 = vector.load %arg11[%c0_13, %c0_14] : memref<1x128xf32, #tpu.memory_space<vmem>>, vector<1x128xf32>
      %23 = vector.broadcast %22 : vector<1x128xf32> to vector<16x128xf32>
      %24 = arith.addf %21, %23 : vector<16x128xf32>
      %cst_15 = arith.constant 0.000000e+00 : f32
      %25 = vector.broadcast %cst_15 : f32 to vector<16x128xf32>
      %26 = arith.maximumf %24, %25 : vector<16x128xf32>
      %27 = arith.truncf %26 : vector<16x128xf32> to vector<16x128xbf16>
      %c0_16 = arith.constant 0 : index
      %c0_17 = arith.constant 0 : index
      %28 = vector.load %arg6[%c0_16, %c0_17] : memref<16x128xbf16, #tpu.memory_space<vmem>>, vector<16x128xbf16>
      tpu.vector_store %arg6[%c0_16, %c0_17], %27 {strides = array<i32>} : memref<16x128xbf16, #tpu.memory_space<vmem>>, vector<16x128xbf16>,
    } else {
    }
    return
  }
  func.func @transform_0(%arg0: i32, %arg1: i32) -> (i32, i32) {
    %c0_i32 = arith.constant 0 : i32
    %c0_i32_0 = arith.constant 0 : i32
    return %arg1, %c0_i32 : i32, i32
  }
  func.func @transform_1(%arg0: i32, %arg1: i32) -> (i32, i32) {
    %c0_i32 = arith.constant 0 : i32
    %c0_i32_0 = arith.constant 0 : i32
    %c0_i32_1 = arith.constant 0 : i32
    return %c0_i32, %c0_i32_0 : i32, i32
  }
  func.func @transform_2(%arg0: i32, %arg1: i32) -> (i32, i32) {
    %c0_i32 = arith.constant 0 : i32
    %c0_i32_0 = arith.constant 0 : i32
    %c0_i32_1 = arith.constant 0 : i32
    return %c0_i32, %c0_i32_0 : i32, i32
  }
  func.func @transform_3(%arg0: i32, %arg1: i32) -> (i32, i32) {
    %c0_i32 = arith.constant 0 : i32
    %c0_i32_0 = arith.constant 0 : i32
    %c0_i32_1 = arith.constant 0 : i32
    return %c0_i32, %c0_i32_0 : i32, i32
  }
  func.func @transform_4(%arg0: i32, %arg1: i32) -> (i32, i32) {
    %0 = arith.muli %arg0, %arg1 : i32
    %c0_i32 = arith.constant 0 : i32
    %c0_i32_0 = arith.constant 0 : i32
    return %0, %c0_i32 : i32, i32
  }
}

module attributes {stable_mosaic.version = 11 : i64} {
  func.func @_pblock_layer_kernel(%arg0: i32, %arg1: i32, %arg2: memref<16x128xbf16, #tpu.memory_space<vmem>>, %arg3: memref<128x128xbf16, #tpu.memory_space<vmem>>, %arg4: memref<1x128xf32, #tpu.memory_space<vmem>>, %arg5: memref<1x128xf32, #tpu.memory_space<vmem>>, %arg6: memref<16x128xf32, #tpu.memory_space<vmem>>, %arg7: memref<1x128xf32, #tpu.memory_space<vmem>>, %arg8: memref<1x128xf32, #tpu.memory_space<vmem>>, %arg9: memref<1x128xf32, #tpu.memory_space<vmem>>, %arg10: memref<1x128xf32, #tpu.memory_space<vmem>>, %arg11: memref<1x128xf32, #tpu.memory_space<vmem>>) attributes {dimension_semantics = [#tpu.dimension_semantics<arbitrary>, #tpu.dimension_semantics<arbitrary>], iteration_bounds = array<i64: 2, 1>, scalar_prefetch = 0 : i64, scratch_operands = 5 : i64, tpu.core_type = #tpu.core_type<tc>, window_params = [{transform_indices = @transform_0, window_bounds = array<i64: 16, 128>}, {pipeline_mode = #tpu.pipeline_mode<synchronous>, transform_indices = @transform_1, window_bounds = array<i64: 128, 128>}, {pipeline_mode = #tpu.pipeline_mode<synchronous>, transform_indices = @transform_2, window_bounds = array<i64: 1, 128>}, {pipeline_mode = #tpu.pipeline_mode<synchronous>, transform_indices = @transform_3, window_bounds = array<i64: 1, 128>}, {transform_indices = @transform_4, window_bounds = array<i64: 16, 128>}]} {
    %c0 = arith.constant 0 : index
    %c0_0 = arith.constant 0 : index
    %0 = vector.load %arg2[%c0, %c0_0] : memref<16x128xbf16, #tpu.memory_space<vmem>>, vector<16x128xbf16>
    %c0_1 = arith.constant 0 : index
    %c0_2 = arith.constant 0 : index
    %1 = vector.load %arg3[%c0_1, %c0_2] : memref<128x128xbf16, #tpu.memory_space<vmem>>, vector<128x128xbf16>
    %cst = arith.constant dense<0.000000e+00> : vector<16x128xf32>
    %2 = tpu.matmul %0, %1, %cst {dimension_numbers = #tpu.dot_dimension_numbers<[1], [0], [0], [1], [0, 0, 1, 1], [], []>} : vector<16x128xbf16>, vector<128x128xbf16>, vector<16x128xf32> -> vector<16x128xf32>
    %c0_i32 = arith.constant 0 : i32
    %3 = arith.cmpi eq, %arg0, %c0_i32 : i32
    %c0_i32_3 = arith.constant 0 : i32
    %4 = arith.cmpi eq, %arg1, %c0_i32_3 : i32
    %5 = arith.andi %3, %4 : i1
    %6 = arith.extui %5 : i1 to i32
    %c0_i32_4 = arith.constant 0 : i32
    %7 = arith.cmpi ne, %6, %c0_i32_4 : i32
    scf.if %7 {
      %cst_11 = arith.constant dense<0.000000e+00> : vector<128xf32>
      %19 = vector.multi_reduction <add>, %2, %cst_11 [0] : vector<16x128xf32> to vector<128xf32>
      %20 = vector.shape_cast %19 : vector<128xf32> to vector<1x128xf32>
      %cst_12 = arith.constant 1.600000e+01 : f32
      %21 = vector.broadcast %cst_12 : f32 to vector<1x128xf32>
      %22 = arith.divf %20, %21 : vector<1x128xf32>
      %c0_13 = arith.constant 0 : index
      %c0_14 = arith.constant 0 : index
      %23 = vector.load %arg7[%c0_13, %c0_14] : memref<1x128xf32, #tpu.memory_space<vmem>>, vector<1x128xf32>
      tpu.vector_store %arg7[%c0_13, %c0_14], %22 {strides = array<i32>} : memref<1x128xf32, #tpu.memory_space<vmem>>, vector<1x128xf32>,
      %cst_15 = arith.constant 0.000000e+00 : f32
      %24 = vector.broadcast %cst_15 : f32 to vector<1x128xf32>
      %c0_16 = arith.constant 0 : index
      %c0_17 = arith.constant 0 : index
      %25 = vector.load %arg8[%c0_16, %c0_17] : memref<1x128xf32, #tpu.memory_space<vmem>>, vector<1x128xf32>
      tpu.vector_store %arg8[%c0_16, %c0_17], %24 {strides = array<i32>} : memref<1x128xf32, #tpu.memory_space<vmem>>, vector<1x128xf32>,
      %cst_18 = arith.constant 0.000000e+00 : f32
      %26 = vector.broadcast %cst_18 : f32 to vector<1x128xf32>
      %c0_19 = arith.constant 0 : index
      %c0_20 = arith.constant 0 : index
      %27 = vector.load %arg9[%c0_19, %c0_20] : memref<1x128xf32, #tpu.memory_space<vmem>>, vector<1x128xf32>
      tpu.vector_store %arg9[%c0_19, %c0_20], %26 {strides = array<i32>} : memref<1x128xf32, #tpu.memory_space<vmem>>, vector<1x128xf32>,
    } else {
    }
    %c0_i32_5 = arith.constant 0 : i32
    %8 = arith.cmpi eq, %arg0, %c0_i32_5 : i32
    %9 = arith.extui %8 : i1 to i32
    %c0_i32_6 = arith.constant 0 : i32
    %10 = arith.cmpi ne, %9, %c0_i32_6 : i32
    scf.if %10 {
      %c0_11 = arith.constant 0 : index
      %c0_12 = arith.constant 0 : index
      %19 = vector.load %arg7[%c0_11, %c0_12] : memref<1x128xf32, #tpu.memory_space<vmem>>, vector<1x128xf32>
      %20 = vector.broadcast %19 : vector<1x128xf32> to vector<16x128xf32>
      %21 = arith.subf %2, %20 : vector<16x128xf32>
      %c0_13 = arith.constant 0 : index
      %c0_14 = arith.constant 0 : index
      %22 = vector.load %arg8[%c0_13, %c0_14] : memref<1x128xf32, #tpu.memory_space<vmem>>, vector<1x128xf32>
      %cst_15 = arith.constant dense<0.000000e+00> : vector<128xf32>
      %23 = vector.multi_reduction <add>, %21, %cst_15 [0] : vector<16x128xf32> to vector<128xf32>
      %24 = vector.shape_cast %23 : vector<128xf32> to vector<1x128xf32>
      %25 = arith.addf %22, %24 : vector<1x128xf32>
      %c0_16 = arith.constant 0 : index
      %c0_17 = arith.constant 0 : index
      %26 = vector.load %arg8[%c0_16, %c0_17] : memref<1x128xf32, #tpu.memory_space<vmem>>, vector<1x128xf32>
      tpu.vector_store %arg8[%c0_16, %c0_17], %25 {strides = array<i32>} : memref<1x128xf32, #tpu.memory_space<vmem>>, vector<1x128xf32>,
      %c0_18 = arith.constant 0 : index
      %c0_19 = arith.constant 0 : index
      %27 = vector.load %arg9[%c0_18, %c0_19] : memref<1x128xf32, #tpu.memory_space<vmem>>, vector<1x128xf32>
      %28 = arith.mulf %21, %21 : vector<16x128xf32>
      %cst_20 = arith.constant dense<0.000000e+00> : vector<128xf32>
      %29 = vector.multi_reduction <add>, %28, %cst_20 [0] : vector<16x128xf32> to vector<128xf32>
      %30 = vector.shape_cast %29 : vector<128xf32> to vector<1x128xf32>
      %31 = arith.addf %27, %30 : vector<1x128xf32>
      %c0_21 = arith.constant 0 : index
      %c0_22 = arith.constant 0 : index
      %32 = vector.load %arg9[%c0_21, %c0_22] : memref<1x128xf32, #tpu.memory_space<vmem>>, vector<1x128xf32>
      tpu.vector_store %arg9[%c0_21, %c0_22], %31 {strides = array<i32>} : memref<1x128xf32, #tpu.memory_space<vmem>>, vector<1x128xf32>,
    } else {
    }
    %c0_i32_7 = arith.constant 0 : i32
    %11 = arith.cmpi eq, %arg0, %c0_i32_7 : i32
    %c0_i32_8 = arith.constant 0 : i32
    %12 = arith.cmpi eq, %arg1, %c0_i32_8 : i32
    %13 = arith.andi %11, %12 : i1
    %14 = arith.extui %13 : i1 to i32
    %c0_i32_9 = arith.constant 0 : i32
    %15 = arith.cmpi ne, %14, %c0_i32_9 : i32
    scf.if %15 {
      %c0_11 = arith.constant 0 : index
      %c0_12 = arith.constant 0 : index
      %19 = vector.load %arg8[%c0_11, %c0_12] : memref<1x128xf32, #tpu.memory_space<vmem>>, vector<1x128xf32>
      %cst_13 = arith.constant 6.250000e-02 : f32
      %20 = vector.broadcast %cst_13 : f32 to vector<1x128xf32>
      %21 = arith.mulf %19, %20 : vector<1x128xf32>
      %c0_14 = arith.constant 0 : index
      %c0_15 = arith.constant 0 : index
      %22 = vector.load %arg9[%c0_14, %c0_15] : memref<1x128xf32, #tpu.memory_space<vmem>>, vector<1x128xf32>
      %cst_16 = arith.constant 6.250000e-02 : f32
      %23 = vector.broadcast %cst_16 : f32 to vector<1x128xf32>
      %24 = arith.mulf %22, %23 : vector<1x128xf32>
      %25 = arith.mulf %21, %21 : vector<1x128xf32>
      %26 = arith.subf %24, %25 : vector<1x128xf32>
      %cst_17 = arith.constant 0.000000e+00 : f32
      %27 = vector.broadcast %cst_17 : f32 to vector<1x128xf32>
      %28 = arith.maximumf %26, %27 : vector<1x128xf32>
      %c0_18 = arith.constant 0 : index
      %c0_19 = arith.constant 0 : index
      %29 = vector.load %arg7[%c0_18, %c0_19] : memref<1x128xf32, #tpu.memory_space<vmem>>, vector<1x128xf32>
      %30 = arith.addf %29, %21 : vector<1x128xf32>
      %c0_20 = arith.constant 0 : index
      %c0_21 = arith.constant 0 : index
      %31 = vector.load %arg4[%c0_20, %c0_21] : memref<1x128xf32, #tpu.memory_space<vmem>>, vector<1x128xf32>
      %cst_22 = arith.constant 9.99999974E-6 : f32
      %32 = vector.broadcast %cst_22 : f32 to vector<1x128xf32>
      %33 = arith.addf %28, %32 : vector<1x128xf32>
      %34 = math.rsqrt %33 : vector<1x128xf32>
      %35 = arith.mulf %31, %34 : vector<1x128xf32>
      %c0_23 = arith.constant 0 : index
      %c0_24 = arith.constant 0 : index
      %36 = vector.load %arg10[%c0_23, %c0_24] : memref<1x128xf32, #tpu.memory_space<vmem>>, vector<1x128xf32>
      tpu.vector_store %arg10[%c0_23, %c0_24], %35 {strides = array<i32>} : memref<1x128xf32, #tpu.memory_space<vmem>>, vector<1x128xf32>,
      %c0_25 = arith.constant 0 : index
      %c0_26 = arith.constant 0 : index
      %37 = vector.load %arg5[%c0_25, %c0_26] : memref<1x128xf32, #tpu.memory_space<vmem>>, vector<1x128xf32>
      %38 = arith.mulf %30, %35 : vector<1x128xf32>
      %39 = arith.subf %37, %38 : vector<1x128xf32>
      %c0_27 = arith.constant 0 : index
      %c0_28 = arith.constant 0 : index
      %40 = vector.load %arg11[%c0_27, %c0_28] : memref<1x128xf32, #tpu.memory_space<vmem>>, vector<1x128xf32>
      tpu.vector_store %arg11[%c0_27, %c0_28], %39 {strides = array<i32>} : memref<1x128xf32, #tpu.memory_space<vmem>>, vector<1x128xf32>,
    } else {
    }
    %c1_i32 = arith.constant 1 : i32
    %16 = arith.cmpi eq, %arg0, %c1_i32 : i32
    %17 = arith.extui %16 : i1 to i32
    %c0_i32_10 = arith.constant 0 : i32
    %18 = arith.cmpi ne, %17, %c0_i32_10 : i32
    scf.if %18 {
      %c0_11 = arith.constant 0 : index
      %c0_12 = arith.constant 0 : index
      %19 = vector.load %arg10[%c0_11, %c0_12] : memref<1x128xf32, #tpu.memory_space<vmem>>, vector<1x128xf32>
      %20 = vector.broadcast %19 : vector<1x128xf32> to vector<16x128xf32>
      %21 = arith.mulf %2, %20 : vector<16x128xf32>
      %c0_13 = arith.constant 0 : index
      %c0_14 = arith.constant 0 : index
      %22 = vector.load %arg11[%c0_13, %c0_14] : memref<1x128xf32, #tpu.memory_space<vmem>>, vector<1x128xf32>
      %23 = vector.broadcast %22 : vector<1x128xf32> to vector<16x128xf32>
      %24 = arith.addf %21, %23 : vector<16x128xf32>
      %cst_15 = arith.constant 0.000000e+00 : f32
      %25 = vector.broadcast %cst_15 : f32 to vector<16x128xf32>
      %26 = arith.maximumf %24, %25 : vector<16x128xf32>
      %c0_16 = arith.constant 0 : index
      %c0_17 = arith.constant 0 : index
      %27 = vector.load %arg6[%c0_16, %c0_17] : memref<16x128xf32, #tpu.memory_space<vmem>>, vector<16x128xf32>
      tpu.vector_store %arg6[%c0_16, %c0_17], %26 {strides = array<i32>} : memref<16x128xf32, #tpu.memory_space<vmem>>, vector<16x128xf32>,
    } else {
    }
    return
  }
  func.func @transform_0(%arg0: i32, %arg1: i32) -> (i32, i32) {
    %c0_i32 = arith.constant 0 : i32
    %c0_i32_0 = arith.constant 0 : i32
    return %arg1, %c0_i32 : i32, i32
  }
  func.func @transform_1(%arg0: i32, %arg1: i32) -> (i32, i32) {
    %c0_i32 = arith.constant 0 : i32
    %c0_i32_0 = arith.constant 0 : i32
    %c0_i32_1 = arith.constant 0 : i32
    return %c0_i32, %c0_i32_0 : i32, i32
  }
  func.func @transform_2(%arg0: i32, %arg1: i32) -> (i32, i32) {
    %c0_i32 = arith.constant 0 : i32
    %c0_i32_0 = arith.constant 0 : i32
    %c0_i32_1 = arith.constant 0 : i32
    return %c0_i32, %c0_i32_0 : i32, i32
  }
  func.func @transform_3(%arg0: i32, %arg1: i32) -> (i32, i32) {
    %c0_i32 = arith.constant 0 : i32
    %c0_i32_0 = arith.constant 0 : i32
    %c0_i32_1 = arith.constant 0 : i32
    return %c0_i32, %c0_i32_0 : i32, i32
  }
  func.func @transform_4(%arg0: i32, %arg1: i32) -> (i32, i32) {
    %0 = arith.muli %arg0, %arg1 : i32
    %c0_i32 = arith.constant 0 : i32
    %c0_i32_0 = arith.constant 0 : i32
    return %0, %c0_i32 : i32, i32
  }
}

</mosaic_0001>

<llo_original>
// kernel: pblock_forward.3
$region0: #{pblock_forward.3}
  #allocation0 [shape = 'u32[]', space=smem, size = 0x4, offset = 0x4, fixed_abs, tag = 'smem constant byte address 0x4 - core index']
  #allocation1 [shape = 'u32[144,128]{1,0:T(1,128)}', space=vmem, size = 0x12000, scoped, tag = 'internal scratch']
  #allocation2 [shape = 'f32[1,128]{1,0:T(1,128)}', space=vmem, size = 0x200, scoped, tag = 'scratch operand']
  #allocation3 [shape = 'f32[1,128]{1,0:T(1,128)}', space=vmem, size = 0x200, scoped, tag = 'scratch operand']
  #allocation4 [shape = 'f32[1,128]{1,0:T(1,128)}', space=vmem, size = 0x200, scoped, tag = 'scratch operand']
  #allocation5 [shape = 'f32[1,128]{1,0:T(1,128)}', space=vmem, size = 0x200, scoped, tag = 'scratch operand']
  #allocation6 [shape = 'f32[1,128]{1,0:T(1,128)}', space=vmem, size = 0x200, scoped, tag = 'scratch operand']
  %s0 = inlined_call_operand.vmem [shape: bf16[16,128], index: 0, kind: input, shape index: {}]
  %s1 = inlined_call_operand.hbm [shape: bf16[128,128], index: 1, kind: input, shape index: {}]
  %s2 = inlined_call_operand.vmem [shape: f32[1,128], index: 2, kind: input, shape index: {}]
  %s3 = inlined_call_operand.vmem [shape: f32[1,128], index: 3, kind: input, shape index: {}]
  %s4 = inlined_call_operand.vmem [shape: f32[16,128], index: 4, kind: output, shape index: {}]
  %s5 = sld [smem:[#allocation0]]
  $region69: #{pblock_forward.3} parent=0
    _
  %s7 = ssub.s32 1, %s5
  %s8 = scalar_select 0, %s7, %s5
  $region1: #{pblock_forward.3} parent=0
    #allocation7 [shape = 'u8[32768]{0}', space=vmem, size = 0x8000, scoped, tag = 'input window, operand 1, single buffered']
    #allocation8 [shape = 's32[2]{0}', space=sflag, size = 0x8, scoped, tag = 'scoped memory for pblock_forward.3']
    %9 = vsyncpa [#allocation8], 0
    loop: start=0, step=1, limit=4
    $region2: #{pblock_forward.3} parent=1 // loop_pre_header
      _
    $region3: #{pblock_forward.3} parent=1 // loop_header
      %s11 = sphi 0, %s15
      %p12 = scmp.ge.s32.totalorder %s11, 4
      %s18 = sphi 0, %s30
      %s19 = sphi 0, %s26
      %s20 = sphi 0, %s18
      %s21 = sphi 0, %s19
      %s22 = sphi 0, %s20
      %s23 = sphi 0, %s21
      %s33 = sphi 0, %s35
      %s36 = sphi 0, %s33
      %s37 = sphi 0, %s36
      %s53 = sphi 0, %s37
      %s57 = sphi 0, %s57
      %s59 = sphi 0, %s57
      %s60 = sphi 0, %s59
      %s74 = sphi 0, %s60
      %s78 = sphi 0, %s78
      %s80 = sphi 0, %s78
      %s81 = sphi 0, %s80
      %s95 = sphi 0, %s81
      %s99 = sphi 0, %s99
      %s101 = sphi 0, %s99
      %s102 = sphi 0, %s101
      %s116 = sphi 0, %s102
      %s124 = sphi 0, %s126
      %s127 = sphi 0, %s124
      %s128 = sphi 0, %s127
      %s144 = sphi 0, %s128
    $region4: #{pblock_forward.3} parent=1 // loop_header_branch
      %14 = sbr.rel (%p12) target = $region8
    $region5: #{pblock_forward.3} parent=1 // loop_body
      %s16 = ssub.s32 %s11, 1
      %s17 = ssub.s32 %s11, 2
      %s24 = sadd.s32 1, %s19
      %p25 = scmp.ge.s32.totalorder %s24, 1
      %s26 = scalar_select %p25, 0, %s24
      %s27 = sadd.s32 1, %s18
      %s28 = scalar_select %p25, %s27, %s18
      %p29 = scmp.ge.s32.totalorder %s28, 2
      %s30 = scalar_select %p29, 0, %s28
      %s31 = ssub.s32 %s19, %s26
      %p32 = scmp.eq.s32.totalorder %s31, 0
      %s34 = sadd.s32 %s33, 1
      %s35 = scalar_select %p32, %s33, %s34
      %p38 = pneg %p32
      %p39 = scmp.eq.s32.totalorder %s11, 1
      %p40 = por %p38, %p39
      %p41 = scmp.ne.s32.totalorder %s33, %s36
      %p42 = scmp.eq.s32.totalorder %s11, 0
      %p43 = por %p41, %p42
      %p44 = scmp.ne.s32.totalorder %s33, %s36
      %p45 = scmp.eq.s32.totalorder %s16, 1
      %p46 = por %p44, %p45
      %p47 = scmp.ne.s32.totalorder %s36, %s37
      %p48 = scmp.eq.s32.totalorder %s16, 0
      %p49 = por %p47, %p48
      %p50 = scmp.ne.s32.totalorder %s36, %s37
      %p51 = scmp.eq.s32.totalorder %s17, 1
      %p52 = por %p50, %p51
      %p54 = scmp.ne.s32.totalorder %s37, %s53
      %p55 = scmp.eq.s32.totalorder %s17, 0
      %p56 = por %p54, %p55
      %s58 = sadd.s32 %s57, 1
      %p61 = scmp.eq.s32.totalorder %s11, 1
      %p62 = scmp.ne.s32.totalorder %s57, %s59
      %p63 = scmp.eq.s32.totalorder %s11, 0
      %p64 = por %p62, %p63
      %p65 = scmp.ne.s32.totalorder %s57, %s59
      %p66 = scmp.eq.s32.totalorder %s16, 1
      %p67 = por %p65, %p66
      %p68 = scmp.ne.s32.totalorder %s59, %s60
      %p69 = scmp.eq.s32.totalorder %s16, 0
      %p70 = por %p68, %p69
      %p71 = scmp.ne.s32.totalorder %s59, %s60
      %p72 = scmp.eq.s32.totalorder %s17, 1
      %p73 = por %p71, %p72
      %p75 = scmp.ne.s32.totalorder %s60, %s74
      %p76 = scmp.eq.s32.totalorder %s17, 0
      %p77 = por %p75, %p76
      %s79 = sadd.s32 %s78, 1
      %p82 = scmp.eq.s32.totalorder %s11, 1
      %p83 = scmp.ne.s32.totalorder %s78, %s80
      %p84 = scmp.eq.s32.totalorder %s11, 0
      %p85 = por %p83, %p84
      %p86 = scmp.ne.s32.totalorder %s78, %s80
      %p87 = scmp.eq.s32.totalorder %s16, 1
      %p88 = por %p86, %p87
      %p89 = scmp.ne.s32.totalorder %s80, %s81
      %p90 = scmp.eq.s32.totalorder %s16, 0
      %p91 = por %p89, %p90
      %p92 = scmp.ne.s32.totalorder %s80, %s81
      %p93 = scmp.eq.s32.totalorder %s17, 1
      %p94 = por %p92, %p93
      %p96 = scmp.ne.s32.totalorder %s81, %s95
      %p97 = scmp.eq.s32.totalorder %s17, 0
      %p98 = por %p96, %p97
      %s100 = sadd.s32 %s99, 1
      %p103 = scmp.eq.s32.totalorder %s11, 1
      %p104 = scmp.ne.s32.totalorder %s99, %s101
      %p105 = scmp.eq.s32.totalorder %s11, 0
      %p106 = por %p104, %p105
      %p107 = scmp.ne.s32.totalorder %s99, %s101
      %p108 = scmp.eq.s32.totalorder %s16, 1
      %p109 = por %p107, %p108
      %p110 = scmp.ne.s32.totalorder %s101, %s102
      %p111 = scmp.eq.s32.totalorder %s16, 0
      %p112 = por %p110, %p111
      %p113 = scmp.ne.s32.totalorder %s101, %s102
      %p114 = scmp.eq.s32.totalorder %s17, 1
      %p115 = por %p113, %p114
      %p117 = scmp.ne.s32.totalorder %s102, %s116
      %p118 = scmp.eq.s32.totalorder %s17, 0
      %p119 = por %p117, %p118
      %s120 = smul.u32 %s18, %s19
      %s121 = smul.u32 %s30, %s26
      %s122 = ssub.s32 %s120, %s121
      %p123 = scmp.eq.s32.totalorder %s122, 0
      %s125 = sadd.s32 %s124, 1
      %s126 = scalar_select %p123, %s124, %s125
      %p129 = pneg %p123
      %p130 = scmp.eq.s32.totalorder %s11, 1
      %p131 = por %p129, %p130
      %p132 = scmp.ne.s32.totalorder %s124, %s127
      %p133 = scmp.eq.s32.totalorder %s11, 0
      %p134 = por %p132, %p133
      %p135 = scmp.ne.s32.totalorder %s124, %s127
      %p136 = scmp.eq.s32.totalorder %s16, 1
      %p137 = por %p135, %p136
      %p138 = scmp.ne.s32.totalorder %s127, %s128
      %p139 = scmp.eq.s32.totalorder %s16, 0
      %p140 = por %p138, %p139
      %p141 = scmp.ne.s32.totalorder %s127, %s128
      %p142 = scmp.eq.s32.totalorder %s17, 1
      %p143 = por %p141, %p142
      %p145 = scmp.ne.s32.totalorder %s128, %s144
      %p146 = scmp.eq.s32.totalorder %s17, 0
      %p147 = por %p145, %p146
      %p148 = scmp.le.s32.totalorder 1, %s11
      %p149 = scmp.lt.s32.totalorder %s11, 3
      %p150 = pnand %p148, %p149
      %p151 = pneg %p150
      // Predicated region
      $region9: #{pblock_forward.3} parent=5 // pred_check
        _
      $region10: #{pblock_forward.3} parent=5 // pred_check_branch
        %153 = sbr.rel (%p150) target = $region12
      $region11: #{pblock_forward.3} parent=5 // pred_region
        %s154 = ssub.s32 %s11, 1
        // Predicated region
        $region13: #{pblock_forward.3} parent=11 // pred_check
          %p155 = pneg %p49
        $region14: #{pblock_forward.3} parent=11 // pred_check_branch
          %157 = sbr.rel (%p155) target = $region16
        $region15: #{pblock_forward.3} parent=11 // pred_region
          %s158 = smul.u32 2, %s21
          %p159 = scmp.lt.s32.totalorder %s158, 1
          %s160 = scalar_select %p159, %s158, 1
          %s161 = smul.addr %s160, 4
          %s162 = scalar_lea.vmem %s0, %s161
          %s163 = smul.u32 2, %s21
        $region16: #{pblock_forward.3} parent=11 // pred_fallthru
          _
        // Predicated region
        $region17: #{pblock_forward.3} parent=11 // pred_check
          %p164 = pneg %p70
        $region18: #{pblock_forward.3} parent=11 // pred_check_branch
          %166 = sbr.rel (%p164) target = $region20
        $region19: #{pblock_forward.3} parent=11 // pred_region
          %s168 = ssub.s32 1024, 1024
          %169 = vsyncadd [#allocation8], %s168
          %s170 = sshll.u32 [#allocation7], 4
          %s171 = int_to_ptr.vmem [resolvable:$true] %s170
          %176 = dma.hbm_to_vmem [thread:$0]  %s1, 1024, %s171, [#allocation8], 64, 64, 4
        $region20: #{pblock_forward.3} parent=11 // pred_fallthru
          _
        // Predicated region
        $region21: #{pblock_forward.3} parent=11 // pred_check
          %p177 = pneg %p91
        $region22: #{pblock_forward.3} parent=11 // pred_check_branch
          %179 = sbr.rel (%p177) target = $region24
        $region23: #{pblock_forward.3} parent=11 // pred_region
          _
        $region24: #{pblock_forward.3} parent=11 // pred_fallthru
          _
        // Predicated region
        $region25: #{pblock_forward.3} parent=11 // pred_check
          %p180 = pneg %p112
        $region26: #{pblock_forward.3} parent=11 // pred_check_branch
          %182 = sbr.rel (%p180) target = $region28
        $region27: #{pblock_forward.3} parent=11 // pred_region
          _
        $region28: #{pblock_forward.3} parent=11 // pred_fallthru
          _
      $region12: #{pblock_forward.3} parent=5 // pred_fallthru
        _
      %p183 = scmp.lt.s32.totalorder %s11, 2
      // Predicated region
      $region29: #{pblock_forward.3} parent=5 // pred_check
        %p184 = pneg %p183
      $region30: #{pblock_forward.3} parent=5 // pred_check_branch
        %186 = sbr.rel (%p184) target = $region32
      $region31: #{pblock_forward.3} parent=5 // pred_region
        _
      $region32: #{pblock_forward.3} parent=5 // pred_fallthru
        _
      %p187 = scmp.le.s32.totalorder 1, %s11
      %p188 = scmp.lt.s32.totalorder %s11, 3
      %p189 = pnand %p187, %p188
      %p190 = pneg %p189
      // Predicated region
      $region33: #{pblock_forward.3} parent=5 // pred_check
        _
      $region34: #{pblock_forward.3} parent=5 // pred_check_branch
        %192 = sbr.rel (%p189) target = $region36
      $region35: #{pblock_forward.3} parent=5 // pred_region
        %s193 = ssub.s32 %s11, 1
        // Predicated region
        $region37: #{pblock_forward.3} parent=35 // pred_check
          %p194 = pneg %p70
        $region38: #{pblock_forward.3} parent=35 // pred_check_branch
          %196 = sbr.rel (%p194) target = $region40
        $region39: #{pblock_forward.3} parent=35 // pred_region
          %197 = dma.done [#allocation8], 1024
        $region40: #{pblock_forward.3} parent=35 // pred_fallthru
          _
        %s198 = smul.u32 2, %s21
        %p199 = scmp.lt.s32.totalorder %s198, 1
        %s200 = scalar_select %p199, %s198, 1
        %s201 = smul.addr %s200, 4
        %s202 = scalar_lea.vmem %s0, %s201
        %p203 = pneg %p49
        %p204 = pneg %p46
        %p205 = pneg %p70
        %p206 = pneg %p67
        %p207 = pneg %p91
        %p208 = pneg %p88
        %p209 = pneg %p112
        %p210 = pneg %p109
        %p211 = pneg %p140
        %p212 = pneg %p137
        %s213 = smul.u32 %s20, %s21
        %s214 = smul.u32 2, %s213
        %p215 = scmp.lt.s32.totalorder %s214, 1
        %s216 = scalar_select %p215, %s214, 1
        %s217 = smul.addr %s216, 8
        %s218 = scalar_lea.vmem %s4, %s217
        %s219 = smul.u32 2, %s21
        %p220 = scmp.lt.s32.totalorder %s219, 1
        %s221 = scalar_select %p220, %s219, 1
        %s222 = smul.addr %s221, 4
        %s223 = scalar_lea.vmem %s0, %s222
        %s224 = smul.u32 2, %s21
        %s225 = smul.u32 %s20, %s21
        %s226 = smul.u32 2, %s225
        %p227 = scmp.lt.s32.totalorder %s226, 1
        %s228 = scalar_select %p227, %s226, 1
        %s229 = smul.addr %s228, 8
        %s230 = scalar_lea.vmem %s4, %s229
        %s231 = smul.u32 %s20, %s21
        %s232 = smul.u32 2, %s231
        %v234 = vld [vmem:[%s223] sm:$0xf]
        %v235 = vld [vmem:[%s223 + $0x4] sm:$0xf]
        %v236 = vld [vmem:[#allocation7] sm:$0xf]
        %v237 = vld [vmem:[#allocation7 + $0x4] sm:$0xf]
        %v238 = vld [vmem:[#allocation7 + $0x8] sm:$0xf]
        %v239 = vld [vmem:[#allocation7 + $0xc] sm:$0xf]
        %v240 = vld [vmem:[#allocation7 + $0x10] sm:$0xf]
        %v241 = vld [vmem:[#allocation7 + $0x14] sm:$0xf]
        %v242 = vld [vmem:[#allocation7 + $0x18] sm:$0xf]
        %v243 = vld [vmem:[#allocation7 + $0x1c] sm:$0xf]
        %v244 = vld [vmem:[#allocation7 + $0x20] sm:$0xf]
        %v245 = vld [vmem:[#allocation7 + $0x24] sm:$0xf]
        %v246 = vld [vmem:[#allocation7 + $0x28] sm:$0xf]
        %v247 = vld [vmem:[#allocation7 + $0x2c] sm:$0xf]
        %v248 = vld [vmem:[#allocation7 + $0x30] sm:$0xf]
        %v249 = vld [vmem:[#allocation7 + $0x34] sm:$0xf]
        %v250 = vld [vmem:[#allocation7 + $0x38] sm:$0xf]
        %v251 = vld [vmem:[#allocation7 + $0x3c] sm:$0xf]
        %v254 = vunpack.c.l.b16 %v234
        %v255 = vunpack.c.l.b16 %v235
        %v256 = vpack.c.b16 %v255, %v254
        %v274 = vunpack.c.l.b16 %v236
        %v275 = vunpack.c.l.b16 %v237
        %v276 = vunpack.c.l.b16 %v238
        %v277 = vunpack.c.l.b16 %v239
        %v278 = vunpack.c.l.b16 %v240
        %v279 = vunpack.c.l.b16 %v241
        %v280 = vunpack.c.l.b16 %v242
        %v281 = vunpack.c.l.b16 %v243
        %v282 = vunpack.c.l.b16 %v244
        %v283 = vunpack.c.l.b16 %v245
        %v284 = vunpack.c.l.b16 %v246
        %v285 = vunpack.c.l.b16 %v247
        %v286 = vunpack.c.l.b16 %v248
        %v287 = vunpack.c.l.b16 %v249
        %v288 = vunpack.c.l.b16 %v250
        %v289 = vunpack.c.l.b16 %v251
        %v290 = vpack.c.b16 %v275, %v274
        %v291 = vpack.c.b16 %v277, %v276
        %v292 = vpack.c.b16 %v279, %v278
        %v293 = vpack.c.b16 %v281, %v280
        %v294 = vpack.c.b16 %v283, %v282
        %v295 = vpack.c.b16 %v285, %v284
        %v296 = vpack.c.b16 %v287, %v286
        %v297 = vpack.c.b16 %v289, %v288
        %306 = vmatprep.subr.bf16.mxu0 0
        %307 = vmatpush1.bf16.msra.mxu0 %v297
        %308 = vmatprep.subr.bf16.mxu0 0
        %309 = vmatpush1.bf16.msra.mxu0 %v296
        %310 = vmatprep.subr.bf16.mxu0 0
        %311 = vmatpush1.bf16.msra.mxu0 %v295
        %312 = vmatprep.subr.bf16.mxu0 0
        %313 = vmatpush1.bf16.msra.mxu0 %v294
        %314 = vmatprep.subr.bf16.mxu0 0
        %315 = vmatpush1.bf16.msra.mxu0 %v293
        %316 = vmatprep.subr.bf16.mxu0 0
        %317 = vmatpush1.bf16.msra.mxu0 %v292
        %318 = vmatprep.subr.bf16.mxu0 0
        %319 = vmatpush1.bf16.msra.mxu0 %v291
        %320 = vmatprep.subr.bf16.mxu0 0
        %321 = vmatpush1.bf16.msra.mxu0 %v290
        %322 = vmatprep.subr.bf16.mxu0 0
        %323 = vmatpush2.bf16.msra.mxu0 0
        %324 = vmatprep.subr.bf16.mxu0 0
        %325 = vmatpush2.bf16.msra.mxu0 0
        %326 = vmatprep.subr.bf16.mxu0 0
        %327 = vmatpush2.bf16.msra.mxu0 0
        %328 = vmatprep.subr.bf16.mxu0 0
        %329 = vmatpush2.bf16.msra.mxu0 0
        %330 = vmatprep.subr.bf16.mxu0 0
        %331 = vmatpush2.bf16.msra.mxu0 0
        %332 = vmatprep.subr.bf16.mxu0 0
        %333 = vmatpush2.bf16.msra.mxu0 0
        %334 = vmatprep.subr.bf16.mxu0 0
        %335 = vmatpush2.bf16.msra.mxu0 0
        %336 = vmatprep.subr.bf16.mxu0 0
        %337 = vmatpush2.bf16.msra.mxu0 0
        %338 = vmatprep.mubr.bf16.mxu0 0
        %339 = vmatmul.mubr.bf16.gmra.mxu0 %v256
        %v340 = vpop.f32.mrf.mxu0
        %v341 = vadd.f32 0.0, %v340
        %v342 = vpop.f32.mrf.mxu0
        %v343 = vpop.f32.mrf.mxu0
        %v344 = vadd.f32 0.0, %v343
        %v345 = vpop.f32.mrf.mxu0
        %346 = vdwg.mxu0
        %p347 = scmp.eq.s32.totalorder %s20, 0
        %p348 = scmp.eq.s32.totalorder %s21, 0
        %p349 = pnand %p347, %p348
        %p350 = pneg %p349
        // Predicated region
        $region41: #{pblock_forward.3} parent=35 // pred_check
          _
        $region42: #{pblock_forward.3} parent=35 // pred_check_branch
          %352 = sbr.rel (%p349) target = $region44
        $region43: #{pblock_forward.3} parent=35 // pred_region
          %v353 = vadd.f32 %v341, %v344
          %v354 = vrot.slane %v353, 4
          %v355 = vadd.f32 %v353, %v354
          %v356 = vrot.slane %v355, 2
          %v357 = vadd.f32 %v355, %v356
          %v358 = vrot.slane %v357, 1
          %v359 = vadd.f32 %v357, %v358
          %v360 = vrcp.pop 16.0
          %v361 = vmul.f32 %v359, %v360
          %362 = vst [vmem:[#allocation2] sm:$0x1] %v361
          %363 = vst [vmem:[#allocation3] sm:$0x1] 0.0
          %364 = vst [vmem:[#allocation4] sm:$0x1] 0.0
        $region44: #{pblock_forward.3} parent=35 // pred_fallthru
          _
        // Predicated region
        $region45: #{pblock_forward.3} parent=35 // pred_check
          %p365 = pneg %p347
        $region46: #{pblock_forward.3} parent=35 // pred_check_branch
          %367 = sbr.rel (%p365) target = $region48
        $region47: #{pblock_forward.3} parent=35 // pred_region
          %v368 = vld [vmem:[#allocation2] sm:$0x1]
          %v370 = vlaneseq
          %v371 = vshrl.u32 %v370, 7
          %v372 = vsub.s32 0, %v371
          %v373 = vrot.slane %v368, %v372
          %v375 = vsub.f32 %v341, %v373
          %v376 = vsub.f32 %v344, %v373
          %v377 = vld [vmem:[#allocation3] sm:$0x1]
          %v378 = vadd.f32 %v375, %v376
          %v379 = vrot.slane %v378, 4
          %v380 = vadd.f32 %v378, %v379
          %v381 = vrot.slane %v380, 2
          %v382 = vadd.f32 %v380, %v381
          %v383 = vrot.slane %v382, 1
          %v384 = vadd.f32 %v382, %v383
          %v385 = vadd.f32 %v377, %v384
          %386 = vst [vmem:[#allocation3] sm:$0x1] %v385
          %v387 = vld [vmem:[#allocation4] sm:$0x1]
          %v388 = vmul.f32 %v375, %v375
          %v389 = vmul.f32 %v376, %v376
          %v390 = vadd.f32 %v388, %v389
          %v391 = vrot.slane %v390, 4
          %v392 = vadd.f32 %v390, %v391
          %v393 = vrot.slane %v392, 2
          %v394 = vadd.f32 %v392, %v393
          %v395 = vrot.slane %v394, 1
          %v396 = vadd.f32 %v394, %v395
          %v397 = vadd.f32 %v387, %v396
          %398 = vst [vmem:[#allocation4] sm:$0x1] %v397
        $region48: #{pblock_forward.3} parent=35 // pred_fallthru
          _
        // Predicated region
        $region49: #{pblock_forward.3} parent=35 // pred_check
          _
        $region50: #{pblock_forward.3} parent=35 // pred_check_branch
          %400 = sbr.rel (%p349) target = $region52
        $region51: #{pblock_forward.3} parent=35 // pred_region
          %v401 = vld [vmem:[#allocation3] sm:$0x1]
          %v402 = vmul.f32 %v401, 0.0625
          %v403 = vld [vmem:[#allocation4] sm:$0x1]
          %v404 = vmul.f32 %v403, 0.0625
          %v405 = vmul.f32 %v402, %v402
          %v406 = vsub.f32 %v404, %v405
          %v407 = vmax.f32 %v406, 0.0
          %v408 = vld [vmem:[#allocation2] sm:$0x1]
          %v409 = vadd.f32 %v408, %v402
          %v410 = vld [vmem:[%s2] sm:$0x1]
          %v411 = vadd.f32 %v407, 1e-05
          %v412 = vrsqrt.pop %v411
          %v413 = vmul.f32 %v410, %v412
          %414 = vst [vmem:[#allocation5] sm:$0x1] %v413
          %v415 = vld [vmem:[%s3] sm:$0x1]
          %v416 = vmul.f32 %v409, %v413
          %v417 = vsub.f32 %v415, %v416
          %418 = vst [vmem:[#allocation6] sm:$0x1] %v417
        $region52: #{pblock_forward.3} parent=35 // pred_fallthru
          _
        %p419 = scmp.eq.s32.totalorder %s20, 1
        // Predicated region
        $region53: #{pblock_forward.3} parent=35 // pred_check
          %p420 = pneg %p419
        $region54: #{pblock_forward.3} parent=35 // pred_check_branch
          %422 = sbr.rel (%p420) target = $region56
        $region55: #{pblock_forward.3} parent=35 // pred_region
          %v423 = vld [vmem:[#allocation5] sm:$0x1]
          %v425 = vlaneseq
          %v426 = vshrl.u32 %v425, 7
          %v427 = vsub.s32 0, %v426
          %v428 = vrot.slane %v423, %v427
          %v430 = vmul.f32 %v341, %v428
          %v431 = vmul.f32 %v344, %v428
          %v432 = vld [vmem:[#allocation6] sm:$0x1]
          %v434 = vlaneseq
          %v435 = vshrl.u32 %v434, 7
          %v436 = vsub.s32 0, %v435
          %v437 = vrot.slane %v432, %v436
          %v439 = vadd.f32 %v430, %v437
          %v440 = vadd.f32 %v431, %v437
          %v441 = vmax.f32 %v439, 0.0
          %v442 = vmax.f32 %v440, 0.0
          %443 = vst [vmem:[%s230] sm:$0xff] %v441
          %444 = vst [vmem:[%s230 + $0x8] sm:$0xff] %v442
        $region56: #{pblock_forward.3} parent=35 // pred_fallthru
          _
        %s445 = smul.u32 %s20, %s21
        %s446 = smul.u32 2, %s445
        %p447 = scmp.lt.s32.totalorder %s446, 1
        %s448 = scalar_select %p447, %s446, 1
        %s449 = smul.addr %s448, 8
        %s450 = scalar_lea.vmem %s4, %s449
        // Predicated region
        $region57: #{pblock_forward.3} parent=35 // pred_check
          %p451 = pneg %p137
        $region58: #{pblock_forward.3} parent=35 // pred_check_branch
          %453 = sbr.rel (%p451) target = $region60
        $region59: #{pblock_forward.3} parent=35 // pred_region
          %s454 = smul.u32 %s20, %s21
          %s455 = smul.u32 2, %s454
        $region60: #{pblock_forward.3} parent=35 // pred_fallthru
          _
      $region36: #{pblock_forward.3} parent=5 // pred_fallthru
        _
      %p456 = scmp.le.s32.totalorder 2, %s11
      // Predicated region
      $region61: #{pblock_forward.3} parent=5 // pred_check
        %p457 = pneg %p456
      $region62: #{pblock_forward.3} parent=5 // pred_check_branch
        %459 = sbr.rel (%p457) target = $region64
      $region63: #{pblock_forward.3} parent=5 // pred_region
        %s460 = ssub.s32 %s11, 2
        // Predicated region
        $region65: #{pblock_forward.3} parent=63 // pred_check
          %p461 = pneg %p143
        $region66: #{pblock_forward.3} parent=63 // pred_check_branch
          %463 = sbr.rel (%p461) target = $region68
        $region67: #{pblock_forward.3} parent=63 // pred_region
          %s464 = smul.u32 %s22, %s23
          %s465 = smul.u32 2, %s464
          %p466 = scmp.lt.s32.totalorder %s465, 1
          %s467 = scalar_select %p466, %s465, 1
          %s468 = smul.addr %s467, 8
          %s469 = scalar_lea.vmem %s4, %s468
        $region68: #{pblock_forward.3} parent=63 // pred_fallthru
          _
      $region64: #{pblock_forward.3} parent=5 // pred_fallthru
        _
    $region6: #{pblock_forward.3} parent=1 // loop_footer
      %s15 = sadd.s32 1, %s11
    $region7: #{pblock_forward.3} parent=1 // loop_footer_branch
      %10 = sbr.rel target = $region3
    $region8: #{pblock_forward.3} parent=1 // loop_exit
      _
    %470 = vsyncpa [#allocation8], 1
    %s471 = scalar_lea.sflag [#allocation8], 1
    %472 = vsyncpa %s471, 1

// kernel: pblock_forward.2
$region0: #{pblock_forward.2}
  #allocation0 [shape = 'u32[]', space=smem, size = 0x4, offset = 0x4, fixed_abs, tag = 'smem constant byte address 0x4 - core index']
  #allocation1 [shape = 'u32[144,128]{1,0:T(1,128)}', space=vmem, size = 0x12000, scoped, tag = 'internal scratch']
  #allocation2 [shape = 'f32[1,128]{1,0:T(1,128)}', space=vmem, size = 0x200, scoped, tag = 'scratch operand']
  #allocation3 [shape = 'f32[1,128]{1,0:T(1,128)}', space=vmem, size = 0x200, scoped, tag = 'scratch operand']
  #allocation4 [shape = 'f32[1,128]{1,0:T(1,128)}', space=vmem, size = 0x200, scoped, tag = 'scratch operand']
  #allocation5 [shape = 'f32[1,128]{1,0:T(1,128)}', space=vmem, size = 0x200, scoped, tag = 'scratch operand']
  #allocation6 [shape = 'f32[1,128]{1,0:T(1,128)}', space=vmem, size = 0x200, scoped, tag = 'scratch operand']
  %s0 = inlined_call_operand.vmem [shape: bf16[16,16], index: 0, kind: input, shape index: {}]
  %s1 = inlined_call_operand.vmem [shape: bf16[16,128], index: 1, kind: input, shape index: {}]
  %s2 = inlined_call_operand.vmem [shape: f32[1,128], index: 2, kind: input, shape index: {}]
  %s3 = inlined_call_operand.vmem [shape: f32[1,128], index: 3, kind: input, shape index: {}]
  %s4 = inlined_call_operand.vmem [shape: bf16[16,128], index: 4, kind: output, shape index: {}]
  %s5 = sld [smem:[#allocation0]]
  $region65: #{pblock_forward.2} parent=0
    _
  %s7 = ssub.s32 1, %s5
  %s8 = scalar_select 0, %s7, %s5
  loop: start=0, step=1, limit=4
  $region2: #{pblock_forward.2} parent=0 // loop_pre_header
    _
  $region3: #{pblock_forward.2} parent=0 // loop_header
    %s10 = sphi 0, %s14
    %p11 = scmp.ge.s32.totalorder %s10, 4
    %s17 = sphi 0, %s29
    %s18 = sphi 0, %s25
    %s19 = sphi 0, %s17
    %s20 = sphi 0, %s18
    %s21 = sphi 0, %s19
    %s22 = sphi 0, %s20
    %s32 = sphi 0, %s34
    %s35 = sphi 0, %s32
    %s36 = sphi 0, %s35
    %s52 = sphi 0, %s36
    %s56 = sphi 0, %s56
    %s58 = sphi 0, %s56
    %s59 = sphi 0, %s58
    %s73 = sphi 0, %s59
    %s77 = sphi 0, %s77
    %s79 = sphi 0, %s77
    %s80 = sphi 0, %s79
    %s94 = sphi 0, %s80
    %s98 = sphi 0, %s98
    %s100 = sphi 0, %s98
    %s101 = sphi 0, %s100
    %s115 = sphi 0, %s101
    %s123 = sphi 0, %s125
    %s126 = sphi 0, %s123
    %s127 = sphi 0, %s126
    %s143 = sphi 0, %s127
  $region4: #{pblock_forward.2} parent=0 // loop_header_branch
    %13 = sbr.rel (%p11) target = $region8
  $region5: #{pblock_forward.2} parent=0 // loop_body
    %s15 = ssub.s32 %s10, 1
    %s16 = ssub.s32 %s10, 2
    %s23 = sadd.s32 1, %s18
    %p24 = scmp.ge.s32.totalorder %s23, 1
    %s25 = scalar_select %p24, 0, %s23
    %s26 = sadd.s32 1, %s17
    %s27 = scalar_select %p24, %s26, %s17
    %p28 = scmp.ge.s32.totalorder %s27, 2
    %s29 = scalar_select %p28, 0, %s27
    %s30 = ssub.s32 %s18, %s25
    %p31 = scmp.eq.s32.totalorder %s30, 0
    %s33 = sadd.s32 %s32, 1
    %s34 = scalar_select %p31, %s32, %s33
    %p37 = pneg %p31
    %p38 = scmp.eq.s32.totalorder %s10, 1
    %p39 = por %p37, %p38
    %p40 = scmp.ne.s32.totalorder %s32, %s35
    %p41 = scmp.eq.s32.totalorder %s10, 0
    %p42 = por %p40, %p41
    %p43 = scmp.ne.s32.totalorder %s32, %s35
    %p44 = scmp.eq.s32.totalorder %s15, 1
    %p45 = por %p43, %p44
    %p46 = scmp.ne.s32.totalorder %s35, %s36
    %p47 = scmp.eq.s32.totalorder %s15, 0
    %p48 = por %p46, %p47
    %p49 = scmp.ne.s32.totalorder %s35, %s36
    %p50 = scmp.eq.s32.totalorder %s16, 1
    %p51 = por %p49, %p50
    %p53 = scmp.ne.s32.totalorder %s36, %s52
    %p54 = scmp.eq.s32.totalorder %s16, 0
    %p55 = por %p53, %p54
    %s57 = sadd.s32 %s56, 1
    %p60 = scmp.eq.s32.totalorder %s10, 1
    %p61 = scmp.ne.s32.totalorder %s56, %s58
    %p62 = scmp.eq.s32.totalorder %s10, 0
    %p63 = por %p61, %p62
    %p64 = scmp.ne.s32.totalorder %s56, %s58
    %p65 = scmp.eq.s32.totalorder %s15, 1
    %p66 = por %p64, %p65
    %p67 = scmp.ne.s32.totalorder %s58, %s59
    %p68 = scmp.eq.s32.totalorder %s15, 0
    %p69 = por %p67, %p68
    %p70 = scmp.ne.s32.totalorder %s58, %s59
    %p71 = scmp.eq.s32.totalorder %s16, 1
    %p72 = por %p70, %p71
    %p74 = scmp.ne.s32.totalorder %s59, %s73
    %p75 = scmp.eq.s32.totalorder %s16, 0
    %p76 = por %p74, %p75
    %s78 = sadd.s32 %s77, 1
    %p81 = scmp.eq.s32.totalorder %s10, 1
    %p82 = scmp.ne.s32.totalorder %s77, %s79
    %p83 = scmp.eq.s32.totalorder %s10, 0
    %p84 = por %p82, %p83
    %p85 = scmp.ne.s32.totalorder %s77, %s79
    %p86 = scmp.eq.s32.totalorder %s15, 1
    %p87 = por %p85, %p86
    %p88 = scmp.ne.s32.totalorder %s79, %s80
    %p89 = scmp.eq.s32.totalorder %s15, 0
    %p90 = por %p88, %p89
    %p91 = scmp.ne.s32.totalorder %s79, %s80
    %p92 = scmp.eq.s32.totalorder %s16, 1
    %p93 = por %p91, %p92
    %p95 = scmp.ne.s32.totalorder %s80, %s94
    %p96 = scmp.eq.s32.totalorder %s16, 0
    %p97 = por %p95, %p96
    %s99 = sadd.s32 %s98, 1
    %p102 = scmp.eq.s32.totalorder %s10, 1
    %p103 = scmp.ne.s32.totalorder %s98, %s100
    %p104 = scmp.eq.s32.totalorder %s10, 0
    %p105 = por %p103, %p104
    %p106 = scmp.ne.s32.totalorder %s98, %s100
    %p107 = scmp.eq.s32.totalorder %s15, 1
    %p108 = por %p106, %p107
    %p109 = scmp.ne.s32.totalorder %s100, %s101
    %p110 = scmp.eq.s32.totalorder %s15, 0
    %p111 = por %p109, %p110
    %p112 = scmp.ne.s32.totalorder %s100, %s101
    %p113 = scmp.eq.s32.totalorder %s16, 1
    %p114 = por %p112, %p113
    %p116 = scmp.ne.s32.totalorder %s101, %s115
    %p117 = scmp.eq.s32.totalorder %s16, 0
    %p118 = por %p116, %p117
    %s119 = smul.u32 %s17, %s18
    %s120 = smul.u32 %s29, %s25
    %s121 = ssub.s32 %s119, %s120
    %p122 = scmp.eq.s32.totalorder %s121, 0
    %s124 = sadd.s32 %s123, 1
    %s125 = scalar_select %p122, %s123, %s124
    %p128 = pneg %p122
    %p129 = scmp.eq.s32.totalorder %s10, 1
    %p130 = por %p128, %p129
    %p131 = scmp.ne.s32.totalorder %s123, %s126
    %p132 = scmp.eq.s32.totalorder %s10, 0
    %p133 = por %p131, %p132
    %p134 = scmp.ne.s32.totalorder %s123, %s126
    %p135 = scmp.eq.s32.totalorder %s15, 1
    %p136 = por %p134, %p135
    %p137 = scmp.ne.s32.totalorder %s126, %s127
    %p138 = scmp.eq.s32.totalorder %s15, 0
    %p139 = por %p137, %p138
    %p140 = scmp.ne.s32.totalorder %s126, %s127
    %p141 = scmp.eq.s32.totalorder %s16, 1
    %p142 = por %p140, %p141
    %p144 = scmp.ne.s32.totalorder %s127, %s143
    %p145 = scmp.eq.s32.totalorder %s16, 0
    %p146 = por %p144, %p145
    %p147 = scmp.le.s32.totalorder 1, %s10
    %p148 = scmp.lt.s32.totalorder %s10, 3
    %p149 = pnand %p147, %p148
    %p150 = pneg %p149
    // Predicated region
    $region9: #{pblock_forward.2} parent=5 // pred_check
      _
    $region10: #{pblock_forward.2} parent=5 // pred_check_branch
      %152 = sbr.rel (%p149) target = $region12
    $region11: #{pblock_forward.2} parent=5 // pred_region
      %s153 = ssub.s32 %s10, 1
      // Predicated region
      $region13: #{pblock_forward.2} parent=11 // pred_check
        %p154 = pneg %p48
      $region14: #{pblock_forward.2} parent=11 // pred_check_branch
        %156 = sbr.rel (%p154) target = $region16
      $region15: #{pblock_forward.2} parent=11 // pred_region
        %s157 = smul.u32 2, %s20
        %p158 = scmp.lt.s32.totalorder %s157, 1
        %s159 = scalar_select %p158, %s157, 1
        %s160 = smul.addr %s159, 4
        %s161 = scalar_lea.vmem %s0, %s160
        %s162 = smul.u32 2, %s20
      $region16: #{pblock_forward.2} parent=11 // pred_fallthru
        _
      // Predicated region
      $region17: #{pblock_forward.2} parent=11 // pred_check
        %p163 = pneg %p69
      $region18: #{pblock_forward.2} parent=11 // pred_check_branch
        %165 = sbr.rel (%p163) target = $region20
      $region19: #{pblock_forward.2} parent=11 // pred_region
        _
      $region20: #{pblock_forward.2} parent=11 // pred_fallthru
        _
      // Predicated region
      $region21: #{pblock_forward.2} parent=11 // pred_check
        %p166 = pneg %p90
      $region22: #{pblock_forward.2} parent=11 // pred_check_branch
        %168 = sbr.rel (%p166) target = $region24
      $region23: #{pblock_forward.2} parent=11 // pred_region
        _
      $region24: #{pblock_forward.2} parent=11 // pred_fallthru
        _
      // Predicated region
      $region25: #{pblock_forward.2} parent=11 // pred_check
        %p169 = pneg %p111
      $region26: #{pblock_forward.2} parent=11 // pred_check_branch
        %171 = sbr.rel (%p169) target = $region28
      $region27: #{pblock_forward.2} parent=11 // pred_region
        _
      $region28: #{pblock_forward.2} parent=11 // pred_fallthru
        _
    $region12: #{pblock_forward.2} parent=5 // pred_fallthru
      _
    %p172 = scmp.lt.s32.totalorder %s10, 2
    // Predicated region
    $region29: #{pblock_forward.2} parent=5 // pred_check
      %p173 = pneg %p172
    $region30: #{pblock_forward.2} parent=5 // pred_check_branch
      %175 = sbr.rel (%p173) target = $region32
    $region31: #{pblock_forward.2} parent=5 // pred_region
      _
    $region32: #{pblock_forward.2} parent=5 // pred_fallthru
      _
    %p176 = scmp.le.s32.totalorder 1, %s10
    %p177 = scmp.lt.s32.totalorder %s10, 3
    %p178 = pnand %p176, %p177
    %p179 = pneg %p178
    // Predicated region
    $region33: #{pblock_forward.2} parent=5 // pred_check
      _
    $region34: #{pblock_forward.2} parent=5 // pred_check_branch
      %181 = sbr.rel (%p178) target = $region36
    $region35: #{pblock_forward.2} parent=5 // pred_region
      %s182 = ssub.s32 %s10, 1
      %s183 = smul.u32 2, %s20
      %p184 = scmp.lt.s32.totalorder %s183, 1
      %s185 = scalar_select %p184, %s183, 1
      %s186 = smul.addr %s185, 4
      %s187 = scalar_lea.vmem %s0, %s186
      %p188 = pneg %p48
      %p189 = pneg %p45
      %p190 = pneg %p69
      %p191 = pneg %p66
      %p192 = pneg %p90
      %p193 = pneg %p87
      %p194 = pneg %p111
      %p195 = pneg %p108
      %p196 = pneg %p139
      %p197 = pneg %p136
      %s198 = smul.u32 %s19, %s20
      %s199 = smul.u32 2, %s198
      %p200 = scmp.lt.s32.totalorder %s199, 1
      %s201 = scalar_select %p200, %s199, 1
      %s202 = smul.addr %s201, 4
      %s203 = scalar_lea.vmem %s4, %s202
      %s204 = smul.u32 2, %s20
      %p205 = scmp.lt.s32.totalorder %s204, 1
      %s206 = scalar_select %p205, %s204, 1
      %s207 = smul.addr %s206, 4
      %s208 = scalar_lea.vmem %s0, %s207
      %s209 = smul.u32 2, %s20
      %s210 = smul.u32 %s19, %s20
      %s211 = smul.u32 2, %s210
      %p212 = scmp.lt.s32.totalorder %s211, 1
      %s213 = scalar_select %p212, %s211, 1
      %s214 = smul.addr %s213, 4
      %s215 = scalar_lea.vmem %s4, %s214
      %s216 = smul.u32 %s19, %s20
      %s217 = smul.u32 2, %s216
      %v219 = vld [vmem:[%s208] sm:$0xf]
      %v220 = vld [vmem:[%s208 + $0x4] sm:$0xf]
      %v221 = vld [vmem:[%s1] sm:$0xf]
      %v222 = vld [vmem:[%s1 + $0x4] sm:$0xf]
      %v225 = vunpack.c.l.b16 %v219
      %v226 = vunpack.c.l.b16 %v220
      %v227 = vpack.c.b16 %v226, %v225
      %v230 = vunpack.c.l.b16 %v221
      %v231 = vunpack.c.l.b16 %v222
      %v232 = vpack.c.b16 %v231, %v230
      %vm234 = vcmask 130048
      %v236 = vsel %vm234, %v227, 0
      %238 = vmatprep.subr.bf16.mxu0 0
      %239 = vmatpush1.bf16.msra.mxu0 0
      %240 = vmatprep.subr.bf16.mxu0 0
      %241 = vmatpush1.bf16.msra.mxu0 0
      %242 = vmatprep.subr.bf16.mxu0 0
      %243 = vmatpush1.bf16.msra.mxu0 0
      %244 = vmatprep.subr.bf16.mxu0 0
      %245 = vmatpush1.bf16.msra.mxu0 0
      %246 = vmatprep.subr.bf16.mxu0 0
      %247 = vmatpush1.bf16.msra.mxu0 0
      %248 = vmatprep.subr.bf16.mxu0 0
      %249 = vmatpush1.bf16.msra.mxu0 0
      %250 = vmatprep.subr.bf16.mxu0 0
      %251 = vmatpush1.bf16.msra.mxu0 0
      %252 = vmatprep.subr.bf16.mxu0 0
      %253 = vmatpush1.bf16.msra.mxu0 %v232
      %254 = vmatprep.subr.bf16.mxu0 0
      %255 = vmatpush2.bf16.msra.mxu0 0
      %256 = vmatprep.subr.bf16.mxu0 0
      %257 = vmatpush2.bf16.msra.mxu0 0
      %258 = vmatprep.subr.bf16.mxu0 0
      %259 = vmatpush2.bf16.msra.mxu0 0
      %260 = vmatprep.subr.bf16.mxu0 0
      %261 = vmatpush2.bf16.msra.mxu0 0
      %262 = vmatprep.subr.bf16.mxu0 0
      %263 = vmatpush2.bf16.msra.mxu0 0
      %264 = vmatprep.subr.bf16.mxu0 0
      %265 = vmatpush2.bf16.msra.mxu0 0
      %266 = vmatprep.subr.bf16.mxu0 0
      %267 = vmatpush2.bf16.msra.mxu0 0
      %268 = vmatprep.subr.bf16.mxu0 0
      %269 = vmatpush2.bf16.msra.mxu0 0
      %270 = vmatprep.mubr.bf16.mxu0 0
      %271 = vmatmul.mubr.bf16.gmra.mxu0 %v236
      %v272 = vpop.f32.mrf.mxu0
      %v273 = vadd.f32 0.0, %v272
      %v274 = vpop.f32.mrf.mxu0
      %v275 = vpop.f32.mrf.mxu0
      %v276 = vadd.f32 0.0, %v275
      %v277 = vpop.f32.mrf.mxu0
      %278 = vdwg.mxu0
      %p279 = scmp.eq.s32.totalorder %s19, 0
      %p280 = scmp.eq.s32.totalorder %s20, 0
      %p281 = pnand %p279, %p280
      %p282 = pneg %p281
      // Predicated region
      $region37: #{pblock_forward.2} parent=35 // pred_check
        _
      $region38: #{pblock_forward.2} parent=35 // pred_check_branch
        %284 = sbr.rel (%p281) target = $region40
      $region39: #{pblock_forward.2} parent=35 // pred_region
        %v285 = vadd.f32 %v273, %v276
        %v286 = vrot.slane %v285, 4
        %v287 = vadd.f32 %v285, %v286
        %v288 = vrot.slane %v287, 2
        %v289 = vadd.f32 %v287, %v288
        %v290 = vrot.slane %v289, 1
        %v291 = vadd.f32 %v289, %v290
        %v292 = vrcp.pop 16.0
        %v293 = vmul.f32 %v291, %v292
        %294 = vst [vmem:[#allocation2] sm:$0x1] %v293
        %295 = vst [vmem:[#allocation3] sm:$0x1] 0.0
        %296 = vst [vmem:[#allocation4] sm:$0x1] 0.0
      $region40: #{pblock_forward.2} parent=35 // pred_fallthru
        _
      // Predicated region
      $region41: #{pblock_forward.2} parent=35 // pred_check
        %p297 = pneg %p279
      $region42: #{pblock_forward.2} parent=35 // pred_check_branch
        %299 = sbr.rel (%p297) target = $region44
      $region43: #{pblock_forward.2} parent=35 // pred_region
        %v300 = vld [vmem:[#allocation2] sm:$0x1]
        %v302 = vlaneseq
        %v303 = vshrl.u32 %v302, 7
        %v304 = vsub.s32 0, %v303
        %v305 = vrot.slane %v300, %v304
        %v307 = vsub.f32 %v273, %v305
        %v308 = vsub.f32 %v276, %v305
        %v309 = vld [vmem:[#allocation3] sm:$0x1]
        %v310 = vadd.f32 %v307, %v308
        %v311 = vrot.slane %v310, 4
        %v312 = vadd.f32 %v310, %v311
        %v313 = vrot.slane %v312, 2
        %v314 = vadd.f32 %v312, %v313
        %v315 = vrot.slane %v314, 1
        %v316 = vadd.f32 %v314, %v315
        %v317 = vadd.f32 %v309, %v316
        %318 = vst [vmem:[#allocation3] sm:$0x1] %v317
        %v319 = vld [vmem:[#allocation4] sm:$0x1]
        %v320 = vmul.f32 %v307, %v307
        %v321 = vmul.f32 %v308, %v308
        %v322 = vadd.f32 %v320, %v321
        %v323 = vrot.slane %v322, 4
        %v324 = vadd.f32 %v322, %v323
        %v325 = vrot.slane %v324, 2
        %v326 = vadd.f32 %v324, %v325
        %v327 = vrot.slane %v326, 1
        %v328 = vadd.f32 %v326, %v327
        %v329 = vadd.f32 %v319, %v328
        %330 = vst [vmem:[#allocation4] sm:$0x1] %v329
      $region44: #{pblock_forward.2} parent=35 // pred_fallthru
        _
      // Predicated region
      $region45: #{pblock_forward.2} parent=35 // pred_check
        _
      $region46: #{pblock_forward.2} parent=35 // pred_check_branch
        %332 = sbr.rel (%p281) target = $region48
      $region47: #{pblock_forward.2} parent=35 // pred_region
        %v333 = vld [vmem:[#allocation3] sm:$0x1]
        %v334 = vmul.f32 %v333, 0.0625
        %v335 = vld [vmem:[#allocation4] sm:$0x1]
        %v336 = vmul.f32 %v335, 0.0625
        %v337 = vmul.f32 %v334, %v334
        %v338 = vsub.f32 %v336, %v337
        %v339 = vmax.f32 %v338, 0.0
        %v340 = vld [vmem:[#allocation2] sm:$0x1]
        %v341 = vadd.f32 %v340, %v334
        %v342 = vld [vmem:[%s2] sm:$0x1]
        %v343 = vadd.f32 %v339, 1e-05
        %v344 = vrsqrt.pop %v343
        %v345 = vmul.f32 %v342, %v344
        %346 = vst [vmem:[#allocation5] sm:$0x1] %v345
        %v347 = vld [vmem:[%s3] sm:$0x1]
        %v348 = vmul.f32 %v341, %v345
        %v349 = vsub.f32 %v347, %v348
        %350 = vst [vmem:[#allocation6] sm:$0x1] %v349
      $region48: #{pblock_forward.2} parent=35 // pred_fallthru
        _
      %p351 = scmp.eq.s32.totalorder %s19, 1
      // Predicated region
      $region49: #{pblock_forward.2} parent=35 // pred_check
        %p352 = pneg %p351
      $region50: #{pblock_forward.2} parent=35 // pred_check_branch
        %354 = sbr.rel (%p352) target = $region52
      $region51: #{pblock_forward.2} parent=35 // pred_region
        %v355 = vld [vmem:[#allocation5] sm:$0x1]
        %v357 = vlaneseq
        %v358 = vshrl.u32 %v357, 7
        %v359 = vsub.s32 0, %v358
        %v360 = vrot.slane %v355, %v359
        %v362 = vmul.f32 %v273, %v360
        %v363 = vmul.f32 %v276, %v360
        %v364 = vld [vmem:[#allocation6] sm:$0x1]
        %v366 = vlaneseq
        %v367 = vshrl.u32 %v366, 7
        %v368 = vsub.s32 0, %v367
        %v369 = vrot.slane %v364, %v368
        %v371 = vadd.f32 %v362, %v369
        %v372 = vadd.f32 %v363, %v369
        %v373 = vmax.f32 %v371, 0.0
        %v374 = vmax.f32 %v372, 0.0
        %v375 = vpack.c.bf16 %v374, %v373
        %v377 = vunpack.c.l.b16 %v375
        %v378 = vunpack.c.h.b16 %v375
        %v379 = vpack.c.b16 %v377, %v377
        %v380 = vpack.c.b16 %v378, %v378
        %383 = vst [vmem:[%s215] sm:$0xf] %v379
        %384 = vst [vmem:[%s215 + $0x4] sm:$0xf] %v380
      $region52: #{pblock_forward.2} parent=35 // pred_fallthru
        _
      %s385 = smul.u32 %s19, %s20
      %s386 = smul.u32 2, %s385
      %p387 = scmp.lt.s32.totalorder %s386, 1
      %s388 = scalar_select %p387, %s386, 1
      %s389 = smul.addr %s388, 4
      %s390 = scalar_lea.vmem %s4, %s389
      // Predicated region
      $region53: #{pblock_forward.2} parent=35 // pred_check
        %p391 = pneg %p136
      $region54: #{pblock_forward.2} parent=35 // pred_check_branch
        %393 = sbr.rel (%p391) target = $region56
      $region55: #{pblock_forward.2} parent=35 // pred_region
        %s394 = smul.u32 %s19, %s20
        %s395 = smul.u32 2, %s394
      $region56: #{pblock_forward.2} parent=35 // pred_fallthru
        _
    $region36: #{pblock_forward.2} parent=5 // pred_fallthru
      _
    %p396 = scmp.le.s32.totalorder 2, %s10
    // Predicated region
    $region57: #{pblock_forward.2} parent=5 // pred_check
      %p397 = pneg %p396
    $region58: #{pblock_forward.2} parent=5 // pred_check_branch
      %399 = sbr.rel (%p397) target = $region60
    $region59: #{pblock_forward.2} parent=5 // pred_region
      %s400 = ssub.s32 %s10, 2
      // Predicated region
      $region61: #{pblock_forward.2} parent=59 // pred_check
        %p401 = pneg %p142
      $region62: #{pblock_forward.2} parent=59 // pred_check_branch
        %403 = sbr.rel (%p401) target = $region64
      $region63: #{pblock_forward.2} parent=59 // pred_region
        %s404 = smul.u32 %s21, %s22
        %s405 = smul.u32 2, %s404
        %p406 = scmp.lt.s32.totalorder %s405, 1
        %s407 = scalar_select %p406, %s405, 1
        %s408 = smul.addr %s407, 4
        %s409 = scalar_lea.vmem %s4, %s408
      $region64: #{pblock_forward.2} parent=59 // pred_fallthru
        _
    $region60: #{pblock_forward.2} parent=5 // pred_fallthru
      _
  $region6: #{pblock_forward.2} parent=0 // loop_footer
    %s14 = sadd.s32 1, %s10
  $region7: #{pblock_forward.2} parent=0 // loop_footer_branch
    %9 = sbr.rel target = $region3
  $region8: #{pblock_forward.2} parent=0 // loop_exit
    _

</llo_original>
